<compile_context>
chip_gen: v5e
topology: v5e:2x2
jax: 0.10.0
libtpu: 0.0.40
codegen_flags: <defaults>
</compile_context>

<pallas_src>
import functools

import jax
import jax.numpy as jnp
from jax.experimental import pallas as pl
from jax.experimental.pallas import tpu as pltpu


def _round_up(x, m):
    return ((x + m - 1) // m) * m


def _cdiv(a, b):
    return (a + b - 1) // b


def _pick_tile(dim, default, unit):
    """Largest tile <= default (aligned to `unit`) that minimizes pad waste.

    E.g. dim=300, default=256, unit=8 -> 152 (padded 304) instead of 256
    (padded 512, ~70% wasted DMA bytes / MXU cycles).
    """
    dim_al = _round_up(max(dim, 1), unit)
    default = max(unit, _round_up(default, unit))
    if dim_al <= default:
        return dim_al                      # single tile, no extra padding
    n = _cdiv(dim_al, default)             # number of tiles needed anyway
    return _round_up(_cdiv(dim_al, n), unit)


def _device_kind():
    try:
        return jax.devices()[0].device_kind.lower()
    except Exception:  # pragma: no cover - defensive
        return ""


def _vmem_capacity(kind):
    try:
        return int(pltpu.get_tpu_info().vmem_capacity_bytes)
    except Exception:
        return (64 << 20) if "v7" in kind else (128 << 20)


def _default_tiles(kind, compute_itemsize):
    """Per-generation default (tm, tn, tk)."""
    if "v5" in kind:
        # v5e: 197 TF/s / ~0.82 TB/s roofline is reached with modest tiles;
        # its single vst slot punishes very wide output tiles.
        return 512, 512, 512
    if "v7" in kind:
        # v7x: 64 MiB VMEM but ~3.2 TB/s HBM -> 512x1024 output tiles already
        # saturate the MXU; bigger tiles only risk VMEM pressure.
        return 512, 1024, 512
    # v6e (and unknown): 128 MiB VMEM, ~1.4 TB/s HBM -> bf16 needs big output
    # tiles (intensity tm*tn/(tm+tn) >= ~700) to become MXU-bound.
    if compute_itemsize <= 2:
        return 1024, 2048, 512
    return 512, 1024, 512


def _linear_kernel(*refs, has_bias, acc_in_out):
    # refs: x [tm, tk], w [tk, tn], (bias [1, tn]), out [tm, tn], (acc [tm, tn])
    x_ref, w_ref = refs[0], refs[1]
    idx = 2
    b_ref = None
    if has_bias:
        b_ref = refs[idx]
        idx += 1
    o_ref = refs[idx]
    idx += 1
    acc_ref = o_ref if acc_in_out else refs[idx]

    k = pl.program_id(2)

    @pl.when(k == 0)
    def _():
        acc_ref[...] = jnp.zeros_like(acc_ref)

    # y[m, n] += sum_k x[m, k] * w[k, n]   (weight already in [K, N] layout)
    acc_ref[...] += jnp.dot(x_ref[...], w_ref[...],
                            preferred_element_type=jnp.float32)

    if has_bias or not acc_in_out:
        @pl.when(k == pl.num_programs(2) - 1)
        def _():
            if acc_in_out:
                o_ref[...] += b_ref[...]
            else:
                acc = acc_ref[...]
                if has_bias:
                    acc = acc + b_ref[...]
                o_ref[...] = acc.astype(o_ref.dtype)


def linear_norm(x, weight, bias=None, *, compute_dtype=None, out_dtype=None,
                tm=None, tn=None, tk=None, weight_layout="nk"):
    """Pallas TPU LinearNorm forward.

    x:      [..., in_features]
    weight: [out_features, in_features] if weight_layout == "nk" (PyTorch
            nn.Linear convention), or a pre-transposed / pre-cast
            [in_features, out_features] array if weight_layout == "kn"
            (recommended for layer-constant weights: cache it once).
    bias:   [out_features] or None (LinearNorm defaults to bias=False)
    compute_dtype: e.g. jnp.bfloat16 to run the MXU in bf16 (f32 accumulate).
    """
    out_dtype = jnp.dtype(x.dtype if out_dtype is None else out_dtype)

    *lead, K = x.shape
    if weight_layout == "nk":
        N, K_w = weight.shape
        w_kn = weight.swapaxes(0, 1)   # one-time [K, N]; constant-folds under
                                       # jit with a constant weight / cache it
    else:
        K_w, N = weight.shape
        w_kn = weight
    assert K == K_w, "in_features mismatch"

    M = 1
    for d in lead:
        M *= d
    x2d = x.reshape(M, K)

    # Wrapper-side cast: halves HBM bytes + VMEM per x/w tile, native MXU rate.
    if compute_dtype is not None:
        compute_dtype = jnp.dtype(compute_dtype)
        if x2d.dtype != compute_dtype:
            x2d = x2d.astype(compute_dtype)
        if w_kn.dtype != compute_dtype:
            w_kn = w_kn.astype(compute_dtype)

    kind = _device_kind()
    vmem_cap = _vmem_capacity(kind)
    d_tm, d_tn, d_tk = _default_tiles(kind, jnp.dtype(x2d.dtype).itemsize)
    tm = d_tm if tm is None else tm
    tn = d_tn if tn is None else tn
    tk = d_tk if tk is None else tk

    # Pad-waste-aware tile sizes: lane dims multiples of 128, sublane of 8.
    tm = _pick_tile(M, tm, 8)
    tn = _pick_tile(N, tn, 128)
    tk = _pick_tile(K, tk, 128)
    Mp, Np, Kp = _round_up(M, tm), _round_up(N, tn), _round_up(K, tk)

    # Zero padding keeps the K-contraction exact; padded N columns are sliced
    # off at the end.  Skip the pad copies entirely when not needed.
    x_p = x2d if (Mp == M and Kp == K) else jnp.pad(x2d, ((0, Mp - M), (0, Kp - K)))
    w_p = w_kn if (Kp == K and Np == N) else jnp.pad(w_kn, ((0, Kp - K), (0, Np - N)))

    has_bias = bias is not None
    acc_in_out = out_dtype == jnp.dtype(jnp.float32)  # accumulate into o_ref

    grid = (Mp // tm, Np // tn, Kp // tk)

    in_specs = [
        pl.BlockSpec((tm, tk), lambda i, j, k: (i, k)),   # x tile
        pl.BlockSpec((tk, tn), lambda i, j, k: (k, j)),   # weight tile [K, N]
    ]
    operands = [x_p, w_p]
    if has_bias:
        b = bias.astype(jnp.float32)
        b_p = b if Np == N else jnp.pad(b, (0, Np - N))
        operands.append(b_p.reshape(1, Np))
        in_specs.append(pl.BlockSpec((1, tn), lambda i, j, k: (0, j)))

    scratch_shapes = [] if acc_in_out else [pltpu.VMEM((tm, tn), jnp.float32)]

    # VMEM budget: double-buffered x/w/out tiles (+ bias, + scratch acc).
    need = (2 * tm * tk * x_p.dtype.itemsize
            + 2 * tk * tn * w_p.dtype.itemsize
            + 2 * tm * tn * out_dtype.itemsize)
    if has_bias:
        need += 2 * 8 * tn * 4
    if not acc_in_out:
        need += tm * tn * 4
    vmem_limit = max(need + (4 << 20), 32 << 20)
    vmem_limit = int(min(vmem_limit, (vmem_cap * 3) // 4))

    kernel = functools.partial(_linear_kernel, has_bias=has_bias,
                               acc_in_out=acc_in_out)

    out_p = pl.pallas_call(
        kernel,
        out_shape=jax.ShapeDtypeStruct((Mp, Np), out_dtype),
        grid_spec=pltpu.PrefetchScalarGridSpec(
            num_scalar_prefetch=0,
            grid=grid,
            in_specs=in_specs,
            out_specs=pl.BlockSpec((tm, tn), lambda i, j, k: (i, j)),
            scratch_shapes=scratch_shapes,
        ),
        compiler_params=pltpu.CompilerParams(
            # M/N parallel (shards across the 2 TCs on v7x), K (reduction)
            # arbitrary and innermost.
            dimension_semantics=("parallel", "parallel", "arbitrary"),
            vmem_limit_bytes=vmem_limit,
        ),
    )(*operands)

    return out_p[:M, :N].reshape(*lead, N)


if __name__ == "__main__":
    key = jax.random.PRNGKey(0)
    k_x, k_w = jax.random.split(key, 2)

    # Small shapes consistent with a Linear layer applied over a sequence.
    B, S, IN, OUT = 2, 8, 32, 48

    x = jax.random.normal(k_x, (B, S, IN), dtype=jnp.float32)
    # Xavier-uniform-style deterministic init for nn.Linear(IN, OUT, bias=False)
    limit = (6.0 / (IN + OUT)) ** 0.5
    weight = jax.random.uniform(k_w, (OUT, IN), dtype=jnp.float32,
                                minval=-limit, maxval=limit)

    out = linear_norm(x, weight, bias=None)   # LinearNorm default: bias=False
    out = jax.block_until_ready(out)

    # Plain-JAX reference (same semantics as the PyTorch module).
    ref = x @ weight.T
    assert out.shape == ref.shape
    assert jnp.allclose(out, ref, atol=1e-5, rtol=1e-5), "mismatch vs reference"

    # Also exercise the bias path once (bias=True variant of the module).
    k_b = jax.random.PRNGKey(1)
    bias = jax.random.normal(k_b, (OUT,), dtype=jnp.float32)
    out_b = jax.block_until_ready(linear_norm(x, weight, bias=bias))
    ref_b = x @ weight.T + bias
    assert jnp.allclose(out_b, ref_b, atol=1e-5, rtol=1e-5), "bias mismatch"

    print("KERNEL_OK")
</pallas_src>

<mosaic_0001>
module attributes {stable_mosaic.version = 11 : i64} {
  func.func @_linear_kernel(%arg0: i32, %arg1: i32, %arg2: i32, %arg3: memref<16x128xf32, #tpu.memory_space<vmem>>, %arg4: memref<128x128xf32, #tpu.memory_space<vmem>>, %arg5: memref<16x128xf32, #tpu.memory_space<vmem>>) attributes {dimension_semantics = [#tpu.dimension_semantics<parallel>, #tpu.dimension_semantics<parallel>, #tpu.dimension_semantics<arbitrary>], iteration_bounds = array<i64: 1, 1, 1>, scalar_prefetch = 0 : i64, scratch_operands = 0 : i64, tpu.core_type = #tpu.core_type<tc>, window_params = [{transform_indices = @transform_0, window_bounds = array<i64: 16, 128>}, {transform_indices = @transform_1, window_bounds = array<i64: 128, 128>}, {transform_indices = @transform_2, window_bounds = array<i64: 16, 128>}]} {
    %c0_i32 = arith.constant 0 : i32
    %0 = arith.cmpi eq, %arg2, %c0_i32 : i32
    %1 = arith.extui %0 : i1 to i32
    %c0_i32_0 = arith.constant 0 : i32
    %2 = arith.cmpi ne, %1, %c0_i32_0 : i32
    scf.if %2 {
      %cst_8 = arith.constant 0.000000e+00 : f32
      %9 = vector.broadcast %cst_8 : f32 to vector<16x128xf32>
      %c0_9 = arith.constant 0 : index
      %c0_10 = arith.constant 0 : index
      %10 = vector.load %arg5[%c0_9, %c0_10] : memref<16x128xf32, #tpu.memory_space<vmem>>, vector<16x128xf32>
      tpu.vector_store %arg5[%c0_9, %c0_10], %9 {strides = array<i32>} : memref<16x128xf32, #tpu.memory_space<vmem>>, vector<16x128xf32>,
    } else {
    }
    %c0 = arith.constant 0 : index
    %c0_1 = arith.constant 0 : index
    %3 = vector.load %arg5[%c0, %c0_1] : memref<16x128xf32, #tpu.memory_space<vmem>>, vector<16x128xf32>
    %c0_2 = arith.constant 0 : index
    %c0_3 = arith.constant 0 : index
    %4 = vector.load %arg3[%c0_2, %c0_3] : memref<16x128xf32, #tpu.memory_space<vmem>>, vector<16x128xf32>
    %c0_4 = arith.constant 0 : index
    %c0_5 = arith.constant 0 : index
    %5 = vector.load %arg4[%c0_4, %c0_5] : memref<128x128xf32, #tpu.memory_space<vmem>>, vector<128x128xf32>
    %cst = arith.constant dense<0.000000e+00> : vector<16x128xf32>
    %6 = tpu.matmul %4, %5, %cst {dimension_numbers = #tpu.dot_dimension_numbers<[1], [0], [0], [1], [0, 0, 1, 1], [], []>} : vector<16x128xf32>, vector<128x128xf32>, vector<16x128xf32> -> vector<16x128xf32>
    %7 = arith.addf %3, %6 : vector<16x128xf32>
    %c0_6 = arith.constant 0 : index
    %c0_7 = arith.constant 0 : index
    %8 = vector.load %arg5[%c0_6, %c0_7] : memref<16x128xf32, #tpu.memory_space<vmem>>, vector<16x128xf32>
    tpu.vector_store %arg5[%c0_6, %c0_7], %7 {strides = array<i32>} : memref<16x128xf32, #tpu.memory_space<vmem>>, vector<16x128xf32>,
    return
  }
  func.func @transform_0(%arg0: i32, %arg1: i32, %arg2: i32) -> (i32, i32) {
    %c0_i32 = arith.constant 0 : i32
    return %arg0, %arg2 : i32, i32
  }
  func.func @transform_1(%arg0: i32, %arg1: i32, %arg2: i32) -> (i32, i32) {
    %c0_i32 = arith.constant 0 : i32
    return %arg2, %arg1 : i32, i32
  }
  func.func @transform_2(%arg0: i32, %arg1: i32, %arg2: i32) -> (i32, i32) {
    %c0_i32 = arith.constant 0 : i32
    return %arg0, %arg1 : i32, i32
  }
}

</mosaic_0001>

<llo_original>
// kernel: tpu_custom_call.1
$region0: #{tpu_custom_call.1}
  #allocation0 [shape = 'u32[]', space=smem, size = 0x4, offset = 0x4, fixed_abs, tag = 'smem constant byte address 0x4 - core index']
  #allocation1 [shape = 'u32[72,128]{1,0:T(1,128)}', space=vmem, size = 0x9000, scoped, tag = 'internal scratch']
  %s0 = inlined_call_operand.hbm [shape: f32[16,128], index: 0, kind: input, shape index: {}]
  %s1 = inlined_call_operand.hbm [shape: f32[128,128], index: 1, kind: input, shape index: {}]
  %s2 = inlined_call_operand.hbm [shape: f32[16,128], index: 2, kind: output, shape index: {}]
  %s3 = sld [smem:[#allocation0]]
  $region30: #{tpu_custom_call.1} parent=0
    _
  %s5 = ssub.s32 1, %s3
  %s6 = scalar_select 0, %s5, %s3
  $region1: #{tpu_custom_call.1} parent=0
    #allocation2 [shape = 'u8[8192]{0}', space=vmem, size = 0x2000, scoped, tag = 'input window, operand 0, single buffered']
    #allocation3 [shape = 's32[1]{0}', space=sflag, size = 0x4, scoped, tag = 'scoped memory for tpu_custom_call.1']
    #allocation4 [shape = 's32[1]{0}', space=sflag, size = 0x4, scoped, tag = 'scoped memory for tpu_custom_call.1']
    #allocation5 [shape = 'u8[65536]{0}', space=vmem, size = 0x10000, scoped, tag = 'input window, operand 1, single buffered']
    #allocation6 [shape = 's32[1]{0}', space=sflag, size = 0x4, scoped, tag = 'scoped memory for tpu_custom_call.1']
    #allocation7 [shape = 'u8[8192]{0}', space=vmem, size = 0x2000, scoped, tag = 'output window, operand 0, single buffered']
    %7 = vsyncpa [#allocation3], 0
    %8 = vsyncpa [#allocation6], 0
    %9 = vsyncpa [#allocation4], 0
    // Predicated region
    $region2: #{tpu_custom_call.1} parent=1 // pred_check
      _
    $region3: #{tpu_custom_call.1} parent=1 // pred_check_branch
      %11 = sbr.rel (0) target = $region5
    $region4: #{tpu_custom_call.1} parent=1 // pred_region
      %13 = vsyncadd [#allocation3], 0
      %s14 = sshll.u32 %s0, 4
      %s15 = int_to_ptr.hbm [resolvable:$true] %s14
      %s16 = sshll.u32 [#allocation2], 4
      %s17 = int_to_ptr.vmem [resolvable:$true] %s16
      %22 = dma.hbm_to_vmem [thread:$0]  %s15, 256, %s17, [#allocation3], 128, 128, 8
    $region5: #{tpu_custom_call.1} parent=1 // pred_fallthru
      _
    // Predicated region
    $region6: #{tpu_custom_call.1} parent=1 // pred_check
      _
    $region7: #{tpu_custom_call.1} parent=1 // pred_check_branch
      %24 = sbr.rel (0) target = $region9
    $region8: #{tpu_custom_call.1} parent=1 // pred_region
      %26 = vsyncadd [#allocation6], 0
      %s27 = sshll.u32 %s1, 4
      %s28 = int_to_ptr.hbm [resolvable:$true] %s27
      %s29 = sshll.u32 [#allocation5], 4
      %s30 = int_to_ptr.vmem [resolvable:$true] %s29
      %35 = dma.hbm_to_vmem [thread:$0]  %s28, 2048, %s30, [#allocation6], 128, 128, 8
    $region9: #{tpu_custom_call.1} parent=1 // pred_fallthru
      _
    // Predicated region
    $region10: #{tpu_custom_call.1} parent=1 // pred_check
      _
    $region11: #{tpu_custom_call.1} parent=1 // pred_check_branch
      %37 = sbr.rel (0) target = $region13
    $region12: #{tpu_custom_call.1} parent=1 // pred_region
      %39 = dma.done [#allocation3], 256
    $region13: #{tpu_custom_call.1} parent=1 // pred_fallthru
      _
    // Predicated region
    $region14: #{tpu_custom_call.1} parent=1 // pred_check
      _
    $region15: #{tpu_custom_call.1} parent=1 // pred_check_branch
      %41 = sbr.rel (0) target = $region17
    $region16: #{tpu_custom_call.1} parent=1 // pred_region
      %43 = dma.done [#allocation6], 2048
    $region17: #{tpu_custom_call.1} parent=1 // pred_fallthru
      _
    %p44 = scmp.eq.s32.totalorder 0, 0
    // Predicated region
    $region18: #{tpu_custom_call.1} parent=1 // pred_check
      %p45 = pneg %p44
    $region19: #{tpu_custom_call.1} parent=1 // pred_check_branch
      %47 = sbr.rel (%p45) target = $region21
    $region20: #{tpu_custom_call.1} parent=1 // pred_region
      %48 = vst [vmem:[#allocation7] sm:$0xff] 0.0
      %49 = vst [vmem:[#allocation7 + $0x8] sm:$0xff] 0.0
    $region21: #{tpu_custom_call.1} parent=1 // pred_fallthru
      _
    %v50 = vld [vmem:[#allocation7] sm:$0xff]
    %v51 = vld [vmem:[#allocation7 + $0x8] sm:$0xff]
    %v52 = vld [vmem:[#allocation2] sm:$0xff]
    %v53 = vld [vmem:[#allocation2 + $0x8] sm:$0xff]
    %v54 = vld [vmem:[#allocation5] sm:$0xff]
    %v55 = vld [vmem:[#allocation5 + $0x8] sm:$0xff]
    %v56 = vld [vmem:[#allocation5 + $0x10] sm:$0xff]
    %v57 = vld [vmem:[#allocation5 + $0x18] sm:$0xff]
    %v58 = vld [vmem:[#allocation5 + $0x20] sm:$0xff]
    %v59 = vld [vmem:[#allocation5 + $0x28] sm:$0xff]
    %v60 = vld [vmem:[#allocation5 + $0x30] sm:$0xff]
    %v61 = vld [vmem:[#allocation5 + $0x38] sm:$0xff]
    %v62 = vld [vmem:[#allocation5 + $0x40] sm:$0xff]
    %v63 = vld [vmem:[#allocation5 + $0x48] sm:$0xff]
    %v64 = vld [vmem:[#allocation5 + $0x50] sm:$0xff]
    %v65 = vld [vmem:[#allocation5 + $0x58] sm:$0xff]
    %v66 = vld [vmem:[#allocation5 + $0x60] sm:$0xff]
    %v67 = vld [vmem:[#allocation5 + $0x68] sm:$0xff]
    %v68 = vld [vmem:[#allocation5 + $0x70] sm:$0xff]
    %v69 = vld [vmem:[#allocation5 + $0x78] sm:$0xff]
    %70 = vmatpush.msra.mxu0 %v69
    %71 = vmatpush.msra.mxu0 %v68
    %72 = vmatpush.msra.mxu0 %v67
    %73 = vmatpush.msra.mxu0 %v66
    %74 = vmatpush.msra.mxu0 %v65
    %75 = vmatpush.msra.mxu0 %v64
    %76 = vmatpush.msra.mxu0 %v63
    %77 = vmatpush.msra.mxu0 %v62
    %78 = vmatpush.msra.mxu0 %v61
    %79 = vmatpush.msra.mxu0 %v60
    %80 = vmatpush.msra.mxu0 %v59
    %81 = vmatpush.msra.mxu0 %v58
    %82 = vmatpush.msra.mxu0 %v57
    %83 = vmatpush.msra.mxu0 %v56
    %84 = vmatpush.msra.mxu0 %v55
    %85 = vmatpush.msra.mxu0 %v54
    %86 = vmatmul.f32.gmra.mxu0 %v52
    %v87 = vpop.f32.mrf.mxu0
    %v88 = vadd.f32 0.0, %v87
    %89 = vmatmul.f32.gmra.mxu0 %v53
    %v90 = vpop.f32.mrf.mxu0
    %v91 = vadd.f32 0.0, %v90
    %92 = vdwg.mxu0
    %v93 = vadd.f32 %v50, %v88
    %v94 = vadd.f32 %v51, %v91
    %95 = vst [vmem:[#allocation7] sm:$0xff] %v93
    %96 = vst [vmem:[#allocation7 + $0x8] sm:$0xff] %v94
    // Predicated region
    $region22: #{tpu_custom_call.1} parent=1 // pred_check
      _
    $region23: #{tpu_custom_call.1} parent=1 // pred_check_branch
      %98 = sbr.rel (0) target = $region25
    $region24: #{tpu_custom_call.1} parent=1 // pred_region
      %100 = vsyncadd [#allocation4], 0
      %s101 = sshll.u32 [#allocation7], 4
      %s102 = int_to_ptr.vmem [resolvable:$true] %s101
      %s103 = sshll.u32 %s2, 4
      %s104 = int_to_ptr.hbm [resolvable:$true] %s103
      %109 = dma.vmem_to_hbm [thread:$0]  %s102, 256, %s104, [#allocation4], 128, 128, 8
    $region25: #{tpu_custom_call.1} parent=1 // pred_fallthru
      _
    // Predicated region
    $region26: #{tpu_custom_call.1} parent=1 // pred_check
      _
    $region27: #{tpu_custom_call.1} parent=1 // pred_check_branch
      %111 = sbr.rel (0) target = $region29
    $region28: #{tpu_custom_call.1} parent=1 // pred_region
      %113 = dma.done [#allocation4], 256
    $region29: #{tpu_custom_call.1} parent=1 // pred_fallthru
      _
    %114 = vsyncpa [#allocation3], 1
    %115 = vsyncpa [#allocation6], 1
    %116 = vsyncpa [#allocation4], 1

</llo_original>
